<compile_context>
chip_gen: v5e
topology: v5e:2x2
jax: 0.10.0
libtpu: 0.0.40
codegen_flags: <defaults>
</compile_context>

<pallas_src>
import jax
import jax.numpy as jnp
import numpy as np
from jax.experimental import pallas as pl
from jax.experimental.pallas import tpu as pltpu


def _round_up(x, m):
    return ((x + m - 1) // m) * m


# Raised above the 16/32 MiB scoped defaults, kept below v7x's 64 MiB physical
# VMEM.  Re-derive per generation at production sizes.
_VMEM_LIMIT_BYTES = 48 * 1024 * 1024


# ---------------------------------------------------------------------------
# Kernel 1: parallel tiled matmul + bias (bf16 operands, f32 accumulation).
# Used for (a) the x @ W_ih^T + b precompute over all timesteps and
#          (b) the hoisted H -> V vocab projection.
# Grid is (N tiles, M tiles) with N OUTERMOST: the weight block index only
# depends on the outer axis, so the (potentially huge) weight operand is
# DMA'd from HBM once per N tile instead of once per (M, N) tile.
# ---------------------------------------------------------------------------
def _matmul_bias_kernel(x_ref, w_ref, b_ref, o_ref):
    o_ref[...] = (
        jnp.dot(x_ref[...], w_ref[...], preferred_element_type=jnp.float32)
        + b_ref[...]
    ).astype(o_ref.dtype)


def matmul_bias(x, w, b, *, out_dtype=jnp.float32, tm=256):
    """(M, K) @ (K, N) + (1, N).  N must be a multiple of 128 (512 preferred)."""
    M, K = x.shape
    N = w.shape[1]
    assert N % 128 == 0, "pad N to a lane multiple in pack_params"
    tn = 512 if N % 512 == 0 else (256 if N % 256 == 0 else 128)

    Mp = _round_up(M, tm)                      # never degrade to tiny M tiles
    if Mp != M:
        x = jnp.pad(x, ((0, Mp - M), (0, 0)))

    out = pl.pallas_call(
        _matmul_bias_kernel,
        out_shape=jax.ShapeDtypeStruct((Mp, N), out_dtype),
        grid_spec=pltpu.PrefetchScalarGridSpec(
            num_scalar_prefetch=0,
            grid=(N // tn, Mp // tm),          # N outer -> weights resident
            in_specs=[
                pl.BlockSpec((tm, K), lambda j, i: (i, 0)),
                pl.BlockSpec((K, tn), lambda j, i: (0, j)),
                pl.BlockSpec((1, tn), lambda j, i: (0, j)),
            ],
            out_specs=pl.BlockSpec((tm, tn), lambda j, i: (i, j)),
        ),
        compiler_params=pltpu.CompilerParams(
            dimension_semantics=("parallel", "parallel"),
            vmem_limit_bytes=_VMEM_LIMIT_BYTES),
    )(x, w, b)
    return out[:M] if Mp != M else out


# ---------------------------------------------------------------------------
# Kernel 2: sequential LSTM recurrence.
# Grid = (batch tiles [parallel], time chunks [arbitrary]).  One grid step
# processes TC timesteps for one batch tile; h/c ride the fori_loop carry and
# are flushed to VMEM scratch only at chunk end.  Gate order follows PyTorch:
# i, f, g, o at stride Hp in the padded layout.
# ---------------------------------------------------------------------------
def _lstm_chunk_kernel(xg_ref, whh_ref, hs_ref, h_sc, c_sc):
    @pl.when(pl.program_id(1) == 0)            # first time-chunk of this batch tile
    def _():
        h_sc[...] = jnp.zeros_like(h_sc)
        c_sc[...] = jnp.zeros_like(c_sc)

    Hp = h_sc.shape[-1]
    tc = xg_ref.shape[0]                       # static chunk length
    mdt = whh_ref.dtype                        # MXU dtype (bf16 prod / f32 check)

    def step(s, carry):
        h, c = carry                           # f32 state in vregs
        gates = xg_ref[s].astype(jnp.float32) + jnp.dot(
            h.astype(mdt), whh_ref[...], preferred_element_type=jnp.float32)
        i_g = jax.nn.sigmoid(gates[:, 0 * Hp:1 * Hp])
        f_g = jax.nn.sigmoid(gates[:, 1 * Hp:2 * Hp])
        g_g = jnp.tanh(gates[:, 2 * Hp:3 * Hp])
        o_g = jax.nn.sigmoid(gates[:, 3 * Hp:4 * Hp])
        c_new = f_g * c + i_g * g_g
        h_new = o_g * jnp.tanh(c_new)
        hs_ref[s] = h_new.astype(hs_ref.dtype)  # contiguous full-vreg store
        return (h_new, c_new)

    # Moderate unroll: full unroll of a long chunk risks vreg spills.
    h_fin, c_fin = jax.lax.fori_loop(
        0, tc, step, (h_sc[...], c_sc[...]), unroll=4)
    h_sc[...] = h_fin
    c_sc[...] = c_fin


def _run_recurrence(xg, whh, *, Tp, Bp, TC, TB, Hp, out_dtype, single_buffer_whh):
    whh_kwargs = {}
    if single_buffer_whh:
        # Grid-invariant operand: the second pipeline buffer is pure VMEM waste.
        whh_kwargs["pipeline_mode"] = pl.Buffered(1)
    return pl.pallas_call(
        _lstm_chunk_kernel,
        out_shape=jax.ShapeDtypeStruct((Tp, Bp, Hp), out_dtype),
        grid_spec=pltpu.PrefetchScalarGridSpec(
            num_scalar_prefetch=0,
            grid=(Bp // TB, Tp // TC),
            in_specs=[
                pl.BlockSpec((TC, TB, 4 * Hp), lambda b, t: (t, b, 0)),
                pl.BlockSpec((Hp, 4 * Hp), lambda b, t: (0, 0), **whh_kwargs),
            ],
            out_specs=pl.BlockSpec((TC, TB, Hp), lambda b, t: (t, b, 0)),
            scratch_shapes=[
                pltpu.VMEM((TB, Hp), jnp.float32),   # h state (f32)
                pltpu.VMEM((TB, Hp), jnp.float32),   # c state (f32)
            ],
        ),
        compiler_params=pltpu.CompilerParams(
            dimension_semantics=("parallel", "arbitrary"),   # batch x time
            vmem_limit_bytes=_VMEM_LIMIT_BYTES),
    )(xg, whh)


# ---------------------------------------------------------------------------
# Parameters
# ---------------------------------------------------------------------------
def make_params(key, embed_size, hidden_size, vocab_size):
    """PyTorch-layout parameters (same shapes as the nn.Module)."""
    ks = jax.random.split(key, 7)
    s = 0.1
    return {
        "embed": jax.random.normal(ks[0], (vocab_size, embed_size), jnp.float32) * s,
        "w_ih": jax.random.normal(ks[1], (4 * hidden_size, embed_size), jnp.float32) * s,
        "w_hh": jax.random.normal(ks[2], (4 * hidden_size, hidden_size), jnp.float32) * s,
        "b_ih": jax.random.normal(ks[3], (4 * hidden_size,), jnp.float32) * s,
        "b_hh": jax.random.normal(ks[4], (4 * hidden_size,), jnp.float32) * s,
        "w_out": jax.random.normal(ks[5], (vocab_size, hidden_size), jnp.float32) * s,
        "b_out": jax.random.normal(ks[6], (vocab_size,), jnp.float32) * s,
    }


def pack_params(p, compute_dtype=jnp.bfloat16):
    """Transpose + zero-pad weights to lane-friendly layouts and cast to the
    MXU compute dtype (biases stay f32; they are added to f32 accumulators).

    Gate blocks are re-laid-out at stride Hp (= round_up(H, 128)) so each gate
    slice inside the kernel lands on a 128-lane boundary.  Zero padding keeps
    padded h/c channels at exactly 0 (sigmoid(0)*0 paths), so results match
    the unpadded LSTM.  Vp is rounded to 512 so the GEMM lane tile is 512.
    """
    fourH, E = p["w_ih"].shape
    H = fourH // 4
    V = p["w_out"].shape[0]
    Hp = _round_up(H, 128)
    Vp = _round_up(V, 512)

    def pad_gate_cols(w_t, n_rows):            # (rows, 4H) -> (n_rows, 4Hp)
        out = jnp.zeros((n_rows, 4 * Hp), jnp.float32)
        for g in range(4):
            out = out.at[: w_t.shape[0], g * Hp:g * Hp + H].set(
                w_t[:, g * H:(g + 1) * H])
        return out

    b = (p["b_ih"] + p["b_hh"])[None, :]       # PyTorch adds both LSTM biases
    return {
        "embed": p["embed"],
        "wih": pad_gate_cols(p["w_ih"].T, E).astype(compute_dtype),      # (E, 4Hp)
        "whh": pad_gate_cols(p["w_hh"].T, Hp).astype(compute_dtype),     # (Hp, 4Hp)
        "b": pad_gate_cols(b, 1),                                        # (1, 4Hp) f32
        "wout": jnp.zeros((Hp, Vp), jnp.float32).at[:H, :V]
                .set(p["w_out"].T).astype(compute_dtype),                # (Hp, Vp)
        "bout": jnp.zeros((1, Vp), jnp.float32).at[0, :V].set(p["b_out"]),
        "H": H, "V": V, "Hp": Hp, "Vp": Vp,
        "compute_dtype": compute_dtype,
    }


# ---------------------------------------------------------------------------
# Forward pass
# ---------------------------------------------------------------------------
def decoder_rnn_forward(features, captions, kp, *, time_chunk=16, batch_chunk=None):
    """features: (B, E) f32; captions: (B, S) int.  Returns (B, S, V) f32 logits.

    time_chunk: ~8-16 on v7x (64 MiB VMEM), up to 64 on v5e/v6e (128 MiB).
    batch_chunk: set to Bp/2 on v7x to split the recurrence across both cores.
    """
    B, E = features.shape
    S = captions.shape[1]
    T = S                                      # 1 feature step + (S-1) tokens
    V, Hp, Vp = kp["V"], kp["Hp"], kp["Vp"]
    cdt = kp["compute_dtype"]

    Bp = _round_up(B, 8)
    TB = Bp if batch_chunk is None else min(_round_up(batch_chunk, 8), Bp)
    Bp = _round_up(Bp, TB)                     # batch tiles must divide Bp
    TC = min(time_chunk, T)
    Tp = _round_up(T, TC)

    # --- glue: embedding gather + concat (plain JAX) ------------------------
    cap = captions[:, :-1].astype(jnp.int32)
    emb = jnp.take(kp["embed"], cap, axis=0)                    # (B, S-1, E)
    inp = jnp.concatenate([features[:, None, :], emb], axis=1)  # (B, T, E)
    # only the small E-wide tensor is re-laid-out time-major
    inp = jnp.transpose(inp, (1, 0, 2))                         # (T, B, E)
    inp = jnp.pad(inp, ((0, Tp - T), (0, Bp - B), (0, 0))).astype(cdt)

    # --- input projection precomputed once for all timesteps (parallel) -----
    # xg stored in the compute dtype (bf16 in production) to halve its HBM
    # write + re-read; promoted to f32 inside the recurrence.
    xg = matmul_bias(inp.reshape(Tp * Bp, E), kp["wih"], kp["b"], out_dtype=cdt)
    xg = xg.reshape(Tp, Bp, 4 * Hp)

    # --- sequential recurrence over (batch tiles, time chunks) --------------
    rec_kwargs = dict(Tp=Tp, Bp=Bp, TC=TC, TB=TB, Hp=Hp, out_dtype=cdt)
    try:
        hs = _run_recurrence(xg, kp["whh"], single_buffer_whh=True, **rec_kwargs)
    except Exception:
        # Fallback for JAX builds where pl.Buffered(1) is not accepted.
        hs = _run_recurrence(xg, kp["whh"], single_buffer_whh=False, **rec_kwargs)

    # --- hoisted output projection (parallel, lane-dense Vp) -----------------
    # Re-layout only the small H-wide hidden states; the V-wide logits tensor
    # is produced batch-first directly and never transposed.
    hs_bf = jnp.transpose(hs[:T], (1, 0, 2)).reshape(Bp * T, Hp)
    logits = matmul_bias(hs_bf, kp["wout"], kp["bout"], out_dtype=jnp.float32)
    logits = logits.reshape(Bp, T, Vp)[:B, :, :V]
    return logits                                               # (B, S, V)


# ---------------------------------------------------------------------------
# Pure-JAX f32 reference (PyTorch-layout params) for validation
# ---------------------------------------------------------------------------
def reference_forward(features, captions, p):
    cap = captions[:, :-1].astype(jnp.int32)
    emb = jnp.take(p["embed"], cap, axis=0)
    inp = jnp.concatenate([features[:, None, :], emb], axis=1)
    B = inp.shape[0]
    H = p["w_hh"].shape[1]
    wih, whh = p["w_ih"].T, p["w_hh"].T
    b = p["b_ih"] + p["b_hh"]

    def step(carry, x_t):
        h, c = carry
        g = x_t @ wih + h @ whh + b
        i = jax.nn.sigmoid(g[:, 0 * H:1 * H])
        f = jax.nn.sigmoid(g[:, 1 * H:2 * H])
        gg = jnp.tanh(g[:, 2 * H:3 * H])
        o = jax.nn.sigmoid(g[:, 3 * H:4 * H])
        c = f * c + i * gg
        h = o * jnp.tanh(c)
        return (h, c), h

    h0 = jnp.zeros((B, H), jnp.float32)
    c0 = jnp.zeros((B, H), jnp.float32)
    _, hs = jax.lax.scan(step, (h0, c0), jnp.transpose(inp, (1, 0, 2)))
    hs = jnp.transpose(hs, (1, 0, 2))                           # (B, T, H)
    return hs @ p["w_out"].T + p["b_out"]


if __name__ == "__main__":
    B = 2            # batch
    E = 32           # embed_size
    H = 32           # hidden_size
    V = 48           # vocab_size
    S = 8            # caption length (T = S after concat with feature step)

    key = jax.random.PRNGKey(0)
    k_feat, k_cap, k_par = jax.random.split(key, 3)

    features = jax.random.normal(k_feat, (B, E), jnp.float32)
    captions = jax.random.randint(k_cap, (B, S), 0, V, jnp.int32)
    params = make_params(k_par, E, H, V)

    ref = reference_forward(features, captions, params)

    # 1) f32 compute path: exact structural validation against the reference.
    kp_f32 = pack_params(params, compute_dtype=jnp.float32)
    out_f32 = jax.block_until_ready(decoder_rnn_forward(features, captions, kp_f32))
    assert out_f32.shape == (B, S, V), out_f32.shape
    assert np.allclose(np.asarray(out_f32), np.asarray(ref), atol=1e-4, rtol=1e-4)

    # 2) bf16 compute path (production default): loose-tolerance validation.
    kp_bf16 = pack_params(params)            # compute_dtype=jnp.bfloat16
    out_bf16 = jax.block_until_ready(decoder_rnn_forward(features, captions, kp_bf16))
    assert out_bf16.shape == (B, S, V), out_bf16.shape
    assert np.allclose(np.asarray(out_bf16), np.asarray(ref), atol=3e-2, rtol=3e-2)

    print("KERNEL_OK")
</pallas_src>

<mosaic_0001>
module attributes {stable_mosaic.version = 11 : i64} {
  func.func @_matmul_bias_kernel(%arg0: i32, %arg1: i32, %arg2: memref<256x32xf32, #tpu.memory_space<vmem>>, %arg3: memref<32x512xf32, #tpu.memory_space<vmem>>, %arg4: memref<1x512xf32, #tpu.memory_space<vmem>>, %arg5: memref<256x512xf32, #tpu.memory_space<vmem>>) attributes {dimension_semantics = [#tpu.dimension_semantics<parallel>, #tpu.dimension_semantics<parallel>], iteration_bounds = array<i64: 1, 1>, scalar_prefetch = 0 : i64, scratch_operands = 0 : i64, tpu.core_type = #tpu.core_type<tc>, window_params = [{transform_indices = @transform_0, window_bounds = array<i64: 256, 32>}, {transform_indices = @transform_1, window_bounds = array<i64: 32, 512>}, {transform_indices = @transform_2, window_bounds = array<i64: 1, 512>}, {transform_indices = @transform_3, window_bounds = array<i64: 256, 512>}]} {
    %c0 = arith.constant 0 : index
    %c0_0 = arith.constant 0 : index
    %0 = vector.load %arg2[%c0, %c0_0] : memref<256x32xf32, #tpu.memory_space<vmem>>, vector<256x32xf32>
    %c0_1 = arith.constant 0 : index
    %c0_2 = arith.constant 0 : index
    %1 = vector.load %arg3[%c0_1, %c0_2] : memref<32x512xf32, #tpu.memory_space<vmem>>, vector<32x512xf32>
    %cst = arith.constant dense<0.000000e+00> : vector<256x512xf32>
    %2 = tpu.matmul %0, %1, %cst {dimension_numbers = #tpu.dot_dimension_numbers<[1], [0], [0], [1], [0, 0, 1, 1], [], []>} : vector<256x32xf32>, vector<32x512xf32>, vector<256x512xf32> -> vector<256x512xf32>
    %c0_3 = arith.constant 0 : index
    %c0_4 = arith.constant 0 : index
    %3 = vector.load %arg4[%c0_3, %c0_4] : memref<1x512xf32, #tpu.memory_space<vmem>>, vector<1x512xf32>
    %4 = vector.broadcast %3 : vector<1x512xf32> to vector<256x512xf32>
    %5 = arith.addf %2, %4 : vector<256x512xf32>
    %c0_5 = arith.constant 0 : index
    %c0_6 = arith.constant 0 : index
    %6 = vector.load %arg5[%c0_5, %c0_6] : memref<256x512xf32, #tpu.memory_space<vmem>>, vector<256x512xf32>
    tpu.vector_store %arg5[%c0_5, %c0_6], %5 {strides = array<i32>} : memref<256x512xf32, #tpu.memory_space<vmem>>, vector<256x512xf32>,
    return
  }
  func.func @transform_0(%arg0: i32, %arg1: i32) -> (i32, i32) {
    %c0_i32 = arith.constant 0 : i32
    %c0_i32_0 = arith.constant 0 : i32
    return %arg1, %c0_i32 : i32, i32
  }
  func.func @transform_1(%arg0: i32, %arg1: i32) -> (i32, i32) {
    %c0_i32 = arith.constant 0 : i32
    %c0_i32_0 = arith.constant 0 : i32
    return %c0_i32, %arg0 : i32, i32
  }
  func.func @transform_2(%arg0: i32, %arg1: i32) -> (i32, i32) {
    %c0_i32 = arith.constant 0 : i32
    %c0_i32_0 = arith.constant 0 : i32
    return %c0_i32, %arg0 : i32, i32
  }
  func.func @transform_3(%arg0: i32, %arg1: i32) -> (i32, i32) {
    %c0_i32 = arith.constant 0 : i32
    return %arg1, %arg0 : i32, i32
  }
}

</mosaic_0001>

<llo_original>
// kernel: tpu_custom_call.1
$region0: #{tpu_custom_call.1}
  #allocation0 [shape = 'u32[]', space=smem, size = 0x4, offset = 0x4, fixed_abs, tag = 'smem constant byte address 0x4 - core index']
  #allocation1 [shape = 'u32[72,128]{1,0:T(1,128)}', space=vmem, size = 0x9000, scoped, tag = 'internal scratch']
  %s0 = inlined_call_operand.vmem [shape: f32[256,32], index: 0, kind: input, shape index: {}]
  %s1 = inlined_call_operand.vmem [shape: f32[32,512], index: 1, kind: input, shape index: {}]
  %s2 = inlined_call_operand.vmem [shape: f32[1,512], index: 2, kind: input, shape index: {}]
  %s3 = inlined_call_operand.hbm [shape: f32[256,512], index: 3, kind: output, shape index: {}]
  %s4 = sld [smem:[#allocation0]]
  $region22: #{tpu_custom_call.1} parent=0
    _
  %s6 = ssub.s32 1, %s4
  %s7 = scalar_select 0, %s6, %s4
  $region1: #{tpu_custom_call.1} parent=0
    #allocation2 [shape = 'u8[524288]{0}', space=vmem, size = 0x80000, scoped, tag = 'output window, operand 0, single buffered']
    #allocation3 [shape = 's32[1]{0}', space=sflag, size = 0x4, scoped, tag = 'scoped memory for tpu_custom_call.1']
    %8 = vsyncpa [#allocation3], 0
    // Predicated region
    $region2: #{tpu_custom_call.1} parent=1 // pred_check
      _
    $region3: #{tpu_custom_call.1} parent=1 // pred_check_branch
      %10 = sbr.rel (0) target = $region5
    $region4: #{tpu_custom_call.1} parent=1 // pred_region
      _
    $region5: #{tpu_custom_call.1} parent=1 // pred_fallthru
      _
    // Predicated region
    $region6: #{tpu_custom_call.1} parent=1 // pred_check
      _
    $region7: #{tpu_custom_call.1} parent=1 // pred_check_branch
      %12 = sbr.rel (0) target = $region9
    $region8: #{tpu_custom_call.1} parent=1 // pred_region
      _
    $region9: #{tpu_custom_call.1} parent=1 // pred_fallthru
      _
    // Predicated region
    $region10: #{tpu_custom_call.1} parent=1 // pred_check
      _
    $region11: #{tpu_custom_call.1} parent=1 // pred_check_branch
      %14 = sbr.rel (0) target = $region13
    $region12: #{tpu_custom_call.1} parent=1 // pred_region
      _
    $region13: #{tpu_custom_call.1} parent=1 // pred_fallthru
      _
    %v15 = vld [vmem:[%s0] sm:$0xff]
    %v16 = vld [vmem:[%s0 + $0x8] sm:$0xff]
    %v17 = vld [vmem:[%s0 + $0x10] sm:$0xff]
    %v18 = vld [vmem:[%s0 + $0x18] sm:$0xff]
    %v19 = vld [vmem:[%s0 + $0x20] sm:$0xff]
    %v20 = vld [vmem:[%s0 + $0x28] sm:$0xff]
    %v21 = vld [vmem:[%s0 + $0x30] sm:$0xff]
    %v22 = vld [vmem:[%s0 + $0x38] sm:$0xff]
    %v23 = vld [vmem:[%s0 + $0x40] sm:$0xff]
    %v24 = vld [vmem:[%s0 + $0x48] sm:$0xff]
    %v25 = vld [vmem:[%s0 + $0x50] sm:$0xff]
    %v26 = vld [vmem:[%s0 + $0x58] sm:$0xff]
    %v27 = vld [vmem:[%s0 + $0x60] sm:$0xff]
    %v28 = vld [vmem:[%s0 + $0x68] sm:$0xff]
    %v29 = vld [vmem:[%s0 + $0x70] sm:$0xff]
    %v30 = vld [vmem:[%s0 + $0x78] sm:$0xff]
    %v31 = vld [vmem:[%s0 + $0x80] sm:$0xff]
    %v32 = vld [vmem:[%s0 + $0x88] sm:$0xff]
    %v33 = vld [vmem:[%s0 + $0x90] sm:$0xff]
    %v34 = vld [vmem:[%s0 + $0x98] sm:$0xff]
    %v35 = vld [vmem:[%s0 + $0xa0] sm:$0xff]
    %v36 = vld [vmem:[%s0 + $0xa8] sm:$0xff]
    %v37 = vld [vmem:[%s0 + $0xb0] sm:$0xff]
    %v38 = vld [vmem:[%s0 + $0xb8] sm:$0xff]
    %v39 = vld [vmem:[%s0 + $0xc0] sm:$0xff]
    %v40 = vld [vmem:[%s0 + $0xc8] sm:$0xff]
    %v41 = vld [vmem:[%s0 + $0xd0] sm:$0xff]
    %v42 = vld [vmem:[%s0 + $0xd8] sm:$0xff]
    %v43 = vld [vmem:[%s0 + $0xe0] sm:$0xff]
    %v44 = vld [vmem:[%s0 + $0xe8] sm:$0xff]
    %v45 = vld [vmem:[%s0 + $0xf0] sm:$0xff]
    %v46 = vld [vmem:[%s0 + $0xf8] sm:$0xff]
    %v47 = vld [vmem:[%s1] sm:$0xff]
    %v48 = vld [vmem:[%s1 + $0x8] sm:$0xff]
    %v49 = vld [vmem:[%s1 + $0x10] sm:$0xff]
    %v50 = vld [vmem:[%s1 + $0x18] sm:$0xff]
    %v51 = vld [vmem:[%s1 + $0x20] sm:$0xff]
    %v52 = vld [vmem:[%s1 + $0x28] sm:$0xff]
    %v53 = vld [vmem:[%s1 + $0x30] sm:$0xff]
    %v54 = vld [vmem:[%s1 + $0x38] sm:$0xff]
    %v55 = vld [vmem:[%s1 + $0x40] sm:$0xff]
    %v56 = vld [vmem:[%s1 + $0x48] sm:$0xff]
    %v57 = vld [vmem:[%s1 + $0x50] sm:$0xff]
    %v58 = vld [vmem:[%s1 + $0x58] sm:$0xff]
    %v59 = vld [vmem:[%s1 + $0x60] sm:$0xff]
    %v60 = vld [vmem:[%s1 + $0x68] sm:$0xff]
    %v61 = vld [vmem:[%s1 + $0x70] sm:$0xff]
    %v62 = vld [vmem:[%s1 + $0x78] sm:$0xff]
    %v63 = vld [vmem:[%s2] sm:$0xf]
    %v65 = vperm.slane %v63, 0
    %v66 = vperm.slane %v63, 1
    %v67 = vperm.slane %v63, 2
    %v68 = vperm.slane %v63, 3
    %vm73 = vcmask 261120
    %v75 = vsel %vm73, %v15, 0
    %v78 = vsel %vm73, %v16, 0
    %v81 = vsel %vm73, %v17, 0
    %v84 = vsel %vm73, %v18, 0
    %v87 = vsel %vm73, %v19, 0
    %v90 = vsel %vm73, %v20, 0
    %v93 = vsel %vm73, %v21, 0
    %v96 = vsel %vm73, %v22, 0
    %v99 = vsel %vm73, %v23, 0
    %v102 = vsel %vm73, %v24, 0
    %v105 = vsel %vm73, %v25, 0
    %v108 = vsel %vm73, %v26, 0
    %v111 = vsel %vm73, %v27, 0
    %v114 = vsel %vm73, %v28, 0
    %v117 = vsel %vm73, %v29, 0
    %v120 = vsel %vm73, %v30, 0
    %v123 = vsel %vm73, %v31, 0
    %v126 = vsel %vm73, %v32, 0
    %v129 = vsel %vm73, %v33, 0
    %v132 = vsel %vm73, %v34, 0
    %v135 = vsel %vm73, %v35, 0
    %v138 = vsel %vm73, %v36, 0
    %v141 = vsel %vm73, %v37, 0
    %v144 = vsel %vm73, %v38, 0
    %v147 = vsel %vm73, %v39, 0
    %v150 = vsel %vm73, %v40, 0
    %v153 = vsel %vm73, %v41, 0
    %v156 = vsel %vm73, %v42, 0
    %v159 = vsel %vm73, %v43, 0
    %v162 = vsel %vm73, %v44, 0
    %v165 = vsel %vm73, %v45, 0
    %v168 = vsel %vm73, %v46, 0
    %170 = vmatpush.msra.mxu0 0.0
    %171 = vmatpush.msra.mxu0 0.0
    %172 = vmatpush.msra.mxu0 0.0
    %173 = vmatpush.msra.mxu0 0.0
    %174 = vmatpush.msra.mxu0 0.0
    %175 = vmatpush.msra.mxu0 0.0
    %176 = vmatpush.msra.mxu0 0.0
    %177 = vmatpush.msra.mxu0 0.0
    %178 = vmatpush.msra.mxu0 0.0
    %179 = vmatpush.msra.mxu0 0.0
    %180 = vmatpush.msra.mxu0 0.0
    %181 = vmatpush.msra.mxu0 0.0
    %182 = vmatpush.msra.mxu0 %v59
    %183 = vmatpush.msra.mxu0 %v55
    %184 = vmatpush.msra.mxu0 %v51
    %185 = vmatpush.msra.mxu0 %v47
    %186 = vmatmul.f32.gmra.mxu0 %v75
    %v187 = vpop.f32.mrf.mxu0
    %v188 = vadd.f32 %v65, %v187
    %189 = vmatmul.f32.gmra.mxu0 %v78
    %v190 = vpop.f32.mrf.mxu0
    %v191 = vadd.f32 %v65, %v190
    %192 = vmatmul.f32.gmra.mxu0 %v81
    %v193 = vpop.f32.mrf.mxu0
    %v194 = vadd.f32 %v65, %v193
    %195 = vmatmul.f32.gmra.mxu0 %v84
    %v196 = vpop.f32.mrf.mxu0
    %v197 = vadd.f32 %v65, %v196
    %198 = vmatmul.f32.gmra.mxu0 %v87
    %v199 = vpop.f32.mrf.mxu0
    %v200 = vadd.f32 %v65, %v199
    %201 = vmatmul.f32.gmra.mxu0 %v90
    %v202 = vpop.f32.mrf.mxu0
    %v203 = vadd.f32 %v65, %v202
    %204 = vmatmul.f32.gmra.mxu0 %v93
    %v205 = vpop.f32.mrf.mxu0
    %v206 = vadd.f32 %v65, %v205
    %207 = vmatmul.f32.gmra.mxu0 %v96
    %v208 = vpop.f32.mrf.mxu0
    %v209 = vadd.f32 %v65, %v208
    %210 = vmatmul.f32.gmra.mxu0 %v99
    %v211 = vpop.f32.mrf.mxu0
    %v212 = vadd.f32 %v65, %v211
    %213 = vmatmul.f32.gmra.mxu0 %v102
    %v214 = vpop.f32.mrf.mxu0
    %v215 = vadd.f32 %v65, %v214
    %216 = vmatmul.f32.gmra.mxu0 %v105
    %v217 = vpop.f32.mrf.mxu0
    %v218 = vadd.f32 %v65, %v217
    %219 = vmatmul.f32.gmra.mxu0 %v108
    %v220 = vpop.f32.mrf.mxu0
    %v221 = vadd.f32 %v65, %v220
    %222 = vmatmul.f32.gmra.mxu0 %v111
    %v223 = vpop.f32.mrf.mxu0
    %v224 = vadd.f32 %v65, %v223
    %225 = vmatmul.f32.gmra.mxu0 %v114
    %v226 = vpop.f32.mrf.mxu0
    %v227 = vadd.f32 %v65, %v226
    %228 = vmatmul.f32.gmra.mxu0 %v117
    %v229 = vpop.f32.mrf.mxu0
    %v230 = vadd.f32 %v65, %v229
    %231 = vmatmul.f32.gmra.mxu0 %v120
    %v232 = vpop.f32.mrf.mxu0
    %v233 = vadd.f32 %v65, %v232
    %234 = vmatmul.f32.gmra.mxu0 %v123
    %v235 = vpop.f32.mrf.mxu0
    %v236 = vadd.f32 %v65, %v235
    %237 = vmatmul.f32.gmra.mxu0 %v126
    %v238 = vpop.f32.mrf.mxu0
    %v239 = vadd.f32 %v65, %v238
    %240 = vmatmul.f32.gmra.mxu0 %v129
    %v241 = vpop.f32.mrf.mxu0
    %v242 = vadd.f32 %v65, %v241
    %243 = vmatmul.f32.gmra.mxu0 %v132
    %v244 = vpop.f32.mrf.mxu0
    %v245 = vadd.f32 %v65, %v244
    %246 = vmatmul.f32.gmra.mxu0 %v135
    %v247 = vpop.f32.mrf.mxu0
    %v248 = vadd.f32 %v65, %v247
    %249 = vmatmul.f32.gmra.mxu0 %v138
    %v250 = vpop.f32.mrf.mxu0
    %v251 = vadd.f32 %v65, %v250
    %252 = vmatmul.f32.gmra.mxu0 %v141
    %v253 = vpop.f32.mrf.mxu0
    %v254 = vadd.f32 %v65, %v253
    %255 = vmatmul.f32.gmra.mxu0 %v144
    %v256 = vpop.f32.mrf.mxu0
    %v257 = vadd.f32 %v65, %v256
    %258 = vmatmul.f32.gmra.mxu0 %v147
    %v259 = vpop.f32.mrf.mxu0
    %v260 = vadd.f32 %v65, %v259
    %261 = vmatmul.f32.gmra.mxu0 %v150
    %v262 = vpop.f32.mrf.mxu0
    %v263 = vadd.f32 %v65, %v262
    %264 = vmatmul.f32.gmra.mxu0 %v153
    %v265 = vpop.f32.mrf.mxu0
    %v266 = vadd.f32 %v65, %v265
    %267 = vmatmul.f32.gmra.mxu0 %v156
    %v268 = vpop.f32.mrf.mxu0
    %v269 = vadd.f32 %v65, %v268
    %270 = vmatmul.f32.gmra.mxu0 %v159
    %v271 = vpop.f32.mrf.mxu0
    %v272 = vadd.f32 %v65, %v271
    %273 = vmatmul.f32.gmra.mxu0 %v162
    %v274 = vpop.f32.mrf.mxu0
    %v275 = vadd.f32 %v65, %v274
    %276 = vmatmul.f32.gmra.mxu0 %v165
    %v277 = vpop.f32.mrf.mxu0
    %v278 = vadd.f32 %v65, %v277
    %279 = vmatmul.f32.gmra.mxu0 %v168
    %v280 = vpop.f32.mrf.mxu0
    %v281 = vadd.f32 %v65, %v280
    %282 = vdwg.mxu0
    %283 = vmatpush.msra.mxu0 0.0
    %284 = vmatpush.msra.mxu0 0.0
    %285 = vmatpush.msra.mxu0 0.0
    %286 = vmatpush.msra.mxu0 0.0
    %287 = vmatpush.msra.mxu0 0.0
    %288 = vmatpush.msra.mxu0 0.0
    %289 = vmatpush.msra.mxu0 0.0
    %290 = vmatpush.msra.mxu0 0.0
    %291 = vmatpush.msra.mxu0 0.0
    %292 = vmatpush.msra.mxu0 0.0
    %293 = vmatpush.msra.mxu0 0.0
    %294 = vmatpush.msra.mxu0 0.0
    %295 = vmatpush.msra.mxu0 %v60
    %296 = vmatpush.msra.mxu0 %v56
    %297 = vmatpush.msra.mxu0 %v52
    %298 = vmatpush.msra.mxu0 %v48
    %299 = vmatmul.f32.gmra.mxu0 %v75
    %v300 = vpop.f32.mrf.mxu0
    %v301 = vadd.f32 %v66, %v300
    %302 = vmatmul.f32.gmra.mxu0 %v78
    %v303 = vpop.f32.mrf.mxu0
    %v304 = vadd.f32 %v66, %v303
    %305 = vmatmul.f32.gmra.mxu0 %v81
    %v306 = vpop.f32.mrf.mxu0
    %v307 = vadd.f32 %v66, %v306
    %308 = vmatmul.f32.gmra.mxu0 %v84
    %v309 = vpop.f32.mrf.mxu0
    %v310 = vadd.f32 %v66, %v309
    %311 = vmatmul.f32.gmra.mxu0 %v87
    %v312 = vpop.f32.mrf.mxu0
    %v313 = vadd.f32 %v66, %v312
    %314 = vmatmul.f32.gmra.mxu0 %v90
    %v315 = vpop.f32.mrf.mxu0
    %v316 = vadd.f32 %v66, %v315
    %317 = vmatmul.f32.gmra.mxu0 %v93
    %v318 = vpop.f32.mrf.mxu0
    %v319 = vadd.f32 %v66, %v318
    %320 = vmatmul.f32.gmra.mxu0 %v96
    %v321 = vpop.f32.mrf.mxu0
    %v322 = vadd.f32 %v66, %v321
    %323 = vmatmul.f32.gmra.mxu0 %v99
    %v324 = vpop.f32.mrf.mxu0
    %v325 = vadd.f32 %v66, %v324
    %326 = vmatmul.f32.gmra.mxu0 %v102
    %v327 = vpop.f32.mrf.mxu0
    %v328 = vadd.f32 %v66, %v327
    %329 = vmatmul.f32.gmra.mxu0 %v105
    %v330 = vpop.f32.mrf.mxu0
    %v331 = vadd.f32 %v66, %v330
    %332 = vmatmul.f32.gmra.mxu0 %v108
    %v333 = vpop.f32.mrf.mxu0
    %v334 = vadd.f32 %v66, %v333
    %335 = vmatmul.f32.gmra.mxu0 %v111
    %v336 = vpop.f32.mrf.mxu0
    %v337 = vadd.f32 %v66, %v336
    %338 = vmatmul.f32.gmra.mxu0 %v114
    %v339 = vpop.f32.mrf.mxu0
    %v340 = vadd.f32 %v66, %v339
    %341 = vmatmul.f32.gmra.mxu0 %v117
    %v342 = vpop.f32.mrf.mxu0
    %v343 = vadd.f32 %v66, %v342
    %344 = vmatmul.f32.gmra.mxu0 %v120
    %v345 = vpop.f32.mrf.mxu0
    %v346 = vadd.f32 %v66, %v345
    %347 = vmatmul.f32.gmra.mxu0 %v123
    %v348 = vpop.f32.mrf.mxu0
    %v349 = vadd.f32 %v66, %v348
    %350 = vmatmul.f32.gmra.mxu0 %v126
    %v351 = vpop.f32.mrf.mxu0
    %v352 = vadd.f32 %v66, %v351
    %353 = vmatmul.f32.gmra.mxu0 %v129
    %v354 = vpop.f32.mrf.mxu0
    %v355 = vadd.f32 %v66, %v354
    %356 = vmatmul.f32.gmra.mxu0 %v132
    %v357 = vpop.f32.mrf.mxu0
    %v358 = vadd.f32 %v66, %v357
    %359 = vmatmul.f32.gmra.mxu0 %v135
    %v360 = vpop.f32.mrf.mxu0
    %v361 = vadd.f32 %v66, %v360
    %362 = vmatmul.f32.gmra.mxu0 %v138
    %v363 = vpop.f32.mrf.mxu0
    %v364 = vadd.f32 %v66, %v363
    %365 = vmatmul.f32.gmra.mxu0 %v141
    %v366 = vpop.f32.mrf.mxu0
    %v367 = vadd.f32 %v66, %v366
    %368 = vmatmul.f32.gmra.mxu0 %v144
    %v369 = vpop.f32.mrf.mxu0
    %v370 = vadd.f32 %v66, %v369
    %371 = vmatmul.f32.gmra.mxu0 %v147
    %v372 = vpop.f32.mrf.mxu0
    %v373 = vadd.f32 %v66, %v372
    %374 = vmatmul.f32.gmra.mxu0 %v150
    %v375 = vpop.f32.mrf.mxu0
    %v376 = vadd.f32 %v66, %v375
    %377 = vmatmul.f32.gmra.mxu0 %v153
    %v378 = vpop.f32.mrf.mxu0
    %v379 = vadd.f32 %v66, %v378
    %380 = vmatmul.f32.gmra.mxu0 %v156
    %v381 = vpop.f32.mrf.mxu0
    %v382 = vadd.f32 %v66, %v381
    %383 = vmatmul.f32.gmra.mxu0 %v159
    %v384 = vpop.f32.mrf.mxu0
    %v385 = vadd.f32 %v66, %v384
    %386 = vmatmul.f32.gmra.mxu0 %v162
    %v387 = vpop.f32.mrf.mxu0
    %v388 = vadd.f32 %v66, %v387
    %389 = vmatmul.f32.gmra.mxu0 %v165
    %v390 = vpop.f32.mrf.mxu0
    %v391 = vadd.f32 %v66, %v390
    %392 = vmatmul.f32.gmra.mxu0 %v168
    %v393 = vpop.f32.mrf.mxu0
    %v394 = vadd.f32 %v66, %v393
    %395 = vdwg.mxu0
    %396 = vmatpush.msra.mxu0 0.0
    %397 = vmatpush.msra.mxu0 0.0
    %398 = vmatpush.msra.mxu0 0.0
    %399 = vmatpush.msra.mxu0 0.0
    %400 = vmatpush.msra.mxu0 0.0
    %401 = vmatpush.msra.mxu0 0.0
    %402 = vmatpush.msra.mxu0 0.0
    %403 = vmatpush.msra.mxu0 0.0
    %404 = vmatpush.msra.mxu0 0.0
    %405 = vmatpush.msra.mxu0 0.0
    %406 = vmatpush.msra.mxu0 0.0
    %407 = vmatpush.msra.mxu0 0.0
    %408 = vmatpush.msra.mxu0 %v61
    %409 = vmatpush.msra.mxu0 %v57
    %410 = vmatpush.msra.mxu0 %v53
    %411 = vmatpush.msra.mxu0 %v49
    %412 = vmatmul.f32.gmra.mxu0 %v75
    %v413 = vpop.f32.mrf.mxu0
    %v414 = vadd.f32 %v67, %v413
    %415 = vmatmul.f32.gmra.mxu0 %v78
    %v416 = vpop.f32.mrf.mxu0
    %v417 = vadd.f32 %v67, %v416
    %418 = vmatmul.f32.gmra.mxu0 %v81
    %v419 = vpop.f32.mrf.mxu0
    %v420 = vadd.f32 %v67, %v419
    %421 = vmatmul.f32.gmra.mxu0 %v84
    %v422 = vpop.f32.mrf.mxu0
    %v423 = vadd.f32 %v67, %v422
    %424 = vmatmul.f32.gmra.mxu0 %v87
    %v425 = vpop.f32.mrf.mxu0
    %v426 = vadd.f32 %v67, %v425
    %427 = vmatmul.f32.gmra.mxu0 %v90
    %v428 = vpop.f32.mrf.mxu0
    %v429 = vadd.f32 %v67, %v428
    %430 = vmatmul.f32.gmra.mxu0 %v93
    %v431 = vpop.f32.mrf.mxu0
    %v432 = vadd.f32 %v67, %v431
    %433 = vmatmul.f32.gmra.mxu0 %v96
    %v434 = vpop.f32.mrf.mxu0
    %v435 = vadd.f32 %v67, %v434
    %436 = vmatmul.f32.gmra.mxu0 %v99
    %v437 = vpop.f32.mrf.mxu0
    %v438 = vadd.f32 %v67, %v437
    %439 = vmatmul.f32.gmra.mxu0 %v102
    %v440 = vpop.f32.mrf.mxu0
    %v441 = vadd.f32 %v67, %v440
    %442 = vmatmul.f32.gmra.mxu0 %v105
    %v443 = vpop.f32.mrf.mxu0
    %v444 = vadd.f32 %v67, %v443
    %445 = vmatmul.f32.gmra.mxu0 %v108
    %v446 = vpop.f32.mrf.mxu0
    %v447 = vadd.f32 %v67, %v446
    %448 = vmatmul.f32.gmra.mxu0 %v111
    %v449 = vpop.f32.mrf.mxu0
    %v450 = vadd.f32 %v67, %v449
    %451 = vmatmul.f32.gmra.mxu0 %v114
    %v452 = vpop.f32.mrf.mxu0
    %v453 = vadd.f32 %v67, %v452
    %454 = vmatmul.f32.gmra.mxu0 %v117
    %v455 = vpop.f32.mrf.mxu0
    %v456 = vadd.f32 %v67, %v455
    %457 = vmatmul.f32.gmra.mxu0 %v120
    %v458 = vpop.f32.mrf.mxu0
    %v459 = vadd.f32 %v67, %v458
    %460 = vmatmul.f32.gmra.mxu0 %v123
    %v461 = vpop.f32.mrf.mxu0
    %v462 = vadd.f32 %v67, %v461
    %463 = vmatmul.f32.gmra.mxu0 %v126
    %v464 = vpop.f32.mrf.mxu0
    %v465 = vadd.f32 %v67, %v464
    %466 = vmatmul.f32.gmra.mxu0 %v129
    %v467 = vpop.f32.mrf.mxu0
    %v468 = vadd.f32 %v67, %v467
    %469 = vmatmul.f32.gmra.mxu0 %v132
    %v470 = vpop.f32.mrf.mxu0
    %v471 = vadd.f32 %v67, %v470
    %472 = vmatmul.f32.gmra.mxu0 %v135
    %v473 = vpop.f32.mrf.mxu0
    %v474 = vadd.f32 %v67, %v473
    %475 = vmatmul.f32.gmra.mxu0 %v138
    %v476 = vpop.f32.mrf.mxu0
    %v477 = vadd.f32 %v67, %v476
    %478 = vmatmul.f32.gmra.mxu0 %v141
    %v479 = vpop.f32.mrf.mxu0
    %v480 = vadd.f32 %v67, %v479
    %481 = vmatmul.f32.gmra.mxu0 %v144
    %v482 = vpop.f32.mrf.mxu0
    %v483 = vadd.f32 %v67, %v482
    %484 = vmatmul.f32.gmra.mxu0 %v147
    %v485 = vpop.f32.mrf.mxu0
    %v486 = vadd.f32 %v67, %v485
    %487 = vmatmul.f32.gmra.mxu0 %v150
    %v488 = vpop.f32.mrf.mxu0
    %v489 = vadd.f32 %v67, %v488
    %490 = vmatmul.f32.gmra.mxu0 %v153
    %v491 = vpop.f32.mrf.mxu0
    %v492 = vadd.f32 %v67, %v491
    %493 = vmatmul.f32.gmra.mxu0 %v156
    %v494 = vpop.f32.mrf.mxu0
    %v495 = vadd.f32 %v67, %v494
    %496 = vmatmul.f32.gmra.mxu0 %v159
    %v497 = vpop.f32.mrf.mxu0
    %v498 = vadd.f32 %v67, %v497
    %499 = vmatmul.f32.gmra.mxu0 %v162
    %v500 = vpop.f32.mrf.mxu0
    %v501 = vadd.f32 %v67, %v500
    %502 = vmatmul.f32.gmra.mxu0 %v165
    %v503 = vpop.f32.mrf.mxu0
    %v504 = vadd.f32 %v67, %v503
    %505 = vmatmul.f32.gmra.mxu0 %v168
    %v506 = vpop.f32.mrf.mxu0
    %v507 = vadd.f32 %v67, %v506
    %508 = vdwg.mxu0
    %509 = vmatpush.msra.mxu0 0.0
    %510 = vmatpush.msra.mxu0 0.0
    %511 = vmatpush.msra.mxu0 0.0
    %512 = vmatpush.msra.mxu0 0.0
    %513 = vmatpush.msra.mxu0 0.0
    %514 = vmatpush.msra.mxu0 0.0
    %515 = vmatpush.msra.mxu0 0.0
    %516 = vmatpush.msra.mxu0 0.0
    %517 = vmatpush.msra.mxu0 0.0
    %518 = vmatpush.msra.mxu0 0.0
    %519 = vmatpush.msra.mxu0 0.0
    %520 = vmatpush.msra.mxu0 0.0
    %521 = vmatpush.msra.mxu0 %v62
    %522 = vmatpush.msra.mxu0 %v58
    %523 = vmatpush.msra.mxu0 %v54
    %524 = vmatpush.msra.mxu0 %v50
    %525 = vmatmul.f32.gmra.mxu0 %v75
    %v526 = vpop.f32.mrf.mxu0
    %v527 = vadd.f32 %v68, %v526
    %528 = vmatmul.f32.gmra.mxu0 %v78
    %v529 = vpop.f32.mrf.mxu0
    %v530 = vadd.f32 %v68, %v529
    %531 = vmatmul.f32.gmra.mxu0 %v81
    %v532 = vpop.f32.mrf.mxu0
    %v533 = vadd.f32 %v68, %v532
    %534 = vmatmul.f32.gmra.mxu0 %v84
    %v535 = vpop.f32.mrf.mxu0
    %v536 = vadd.f32 %v68, %v535
    %537 = vmatmul.f32.gmra.mxu0 %v87
    %v538 = vpop.f32.mrf.mxu0
    %v539 = vadd.f32 %v68, %v538
    %540 = vmatmul.f32.gmra.mxu0 %v90
    %v541 = vpop.f32.mrf.mxu0
    %v542 = vadd.f32 %v68, %v541
    %543 = vmatmul.f32.gmra.mxu0 %v93
    %v544 = vpop.f32.mrf.mxu0
    %v545 = vadd.f32 %v68, %v544
    %546 = vmatmul.f32.gmra.mxu0 %v96
    %v547 = vpop.f32.mrf.mxu0
    %v548 = vadd.f32 %v68, %v547
    %549 = vmatmul.f32.gmra.mxu0 %v99
    %v550 = vpop.f32.mrf.mxu0
    %v551 = vadd.f32 %v68, %v550
    %552 = vmatmul.f32.gmra.mxu0 %v102
    %v553 = vpop.f32.mrf.mxu0
    %v554 = vadd.f32 %v68, %v553
    %555 = vmatmul.f32.gmra.mxu0 %v105
    %v556 = vpop.f32.mrf.mxu0
    %v557 = vadd.f32 %v68, %v556
    %558 = vmatmul.f32.gmra.mxu0 %v108
    %v559 = vpop.f32.mrf.mxu0
    %v560 = vadd.f32 %v68, %v559
    %561 = vmatmul.f32.gmra.mxu0 %v111
    %v562 = vpop.f32.mrf.mxu0
    %v563 = vadd.f32 %v68, %v562
    %564 = vmatmul.f32.gmra.mxu0 %v114
    %v565 = vpop.f32.mrf.mxu0
    %v566 = vadd.f32 %v68, %v565
    %567 = vmatmul.f32.gmra.mxu0 %v117
    %v568 = vpop.f32.mrf.mxu0
    %v569 = vadd.f32 %v68, %v568
    %570 = vmatmul.f32.gmra.mxu0 %v120
    %v571 = vpop.f32.mrf.mxu0
    %v572 = vadd.f32 %v68, %v571
    %573 = vmatmul.f32.gmra.mxu0 %v123
    %v574 = vpop.f32.mrf.mxu0
    %v575 = vadd.f32 %v68, %v574
    %576 = vmatmul.f32.gmra.mxu0 %v126
    %v577 = vpop.f32.mrf.mxu0
    %v578 = vadd.f32 %v68, %v577
    %579 = vmatmul.f32.gmra.mxu0 %v129
    %v580 = vpop.f32.mrf.mxu0
    %v581 = vadd.f32 %v68, %v580
    %582 = vmatmul.f32.gmra.mxu0 %v132
    %v583 = vpop.f32.mrf.mxu0
    %v584 = vadd.f32 %v68, %v583
    %585 = vmatmul.f32.gmra.mxu0 %v135
    %v586 = vpop.f32.mrf.mxu0
    %v587 = vadd.f32 %v68, %v586
    %588 = vmatmul.f32.gmra.mxu0 %v138
    %v589 = vpop.f32.mrf.mxu0
    %v590 = vadd.f32 %v68, %v589
    %591 = vmatmul.f32.gmra.mxu0 %v141
    %v592 = vpop.f32.mrf.mxu0
    %v593 = vadd.f32 %v68, %v592
    %594 = vmatmul.f32.gmra.mxu0 %v144
    %v595 = vpop.f32.mrf.mxu0
    %v596 = vadd.f32 %v68, %v595
    %597 = vmatmul.f32.gmra.mxu0 %v147
    %v598 = vpop.f32.mrf.mxu0
    %v599 = vadd.f32 %v68, %v598
    %600 = vmatmul.f32.gmra.mxu0 %v150
    %v601 = vpop.f32.mrf.mxu0
    %v602 = vadd.f32 %v68, %v601
    %603 = vmatmul.f32.gmra.mxu0 %v153
    %v604 = vpop.f32.mrf.mxu0
    %v605 = vadd.f32 %v68, %v604
    %606 = vmatmul.f32.gmra.mxu0 %v156
    %v607 = vpop.f32.mrf.mxu0
    %v608 = vadd.f32 %v68, %v607
    %609 = vmatmul.f32.gmra.mxu0 %v159
    %v610 = vpop.f32.mrf.mxu0
    %v611 = vadd.f32 %v68, %v610
    %612 = vmatmul.f32.gmra.mxu0 %v162
    %v613 = vpop.f32.mrf.mxu0
    %v614 = vadd.f32 %v68, %v613
    %615 = vmatmul.f32.gmra.mxu0 %v165
    %v616 = vpop.f32.mrf.mxu0
    %v617 = vadd.f32 %v68, %v616
    %618 = vmatmul.f32.gmra.mxu0 %v168
    %v619 = vpop.f32.mrf.mxu0
    %v620 = vadd.f32 %v68, %v619
    %621 = vdwg.mxu0
    %622 = vst [vmem:[#allocation2] sm:$0xff] %v188
    %623 = vst [vmem:[#allocation2 + $0x8] sm:$0xff] %v301
    %624 = vst [vmem:[#allocation2 + $0x10] sm:$0xff] %v414
    %625 = vst [vmem:[#allocation2 + $0x18] sm:$0xff] %v527
    %626 = vst [vmem:[#allocation2 + $0x20] sm:$0xff] %v191
    %627 = vst [vmem:[#allocation2 + $0x28] sm:$0xff] %v304
    %628 = vst [vmem:[#allocation2 + $0x30] sm:$0xff] %v417
    %629 = vst [vmem:[#allocation2 + $0x38] sm:$0xff] %v530
    %630 = vst [vmem:[#allocation2 + $0x40] sm:$0xff] %v194
    %631 = vst [vmem:[#allocation2 + $0x48] sm:$0xff] %v307
    %632 = vst [vmem:[#allocation2 + $0x50] sm:$0xff] %v420
    %633 = vst [vmem:[#allocation2 + $0x58] sm:$0xff] %v533
    %634 = vst [vmem:[#allocation2 + $0x60] sm:$0xff] %v197
    %635 = vst [vmem:[#allocation2 + $0x68] sm:$0xff] %v310
    %636 = vst [vmem:[#allocation2 + $0x70] sm:$0xff] %v423
    %637 = vst [vmem:[#allocation2 + $0x78] sm:$0xff] %v536
    %638 = vst [vmem:[#allocation2 + $0x80] sm:$0xff] %v200
    %639 = vst [vmem:[#allocation2 + $0x88] sm:$0xff] %v313
    %640 = vst [vmem:[#allocation2 + $0x90] sm:$0xff] %v426
    %641 = vst [vmem:[#allocation2 + $0x98] sm:$0xff] %v539
    %642 = vst [vmem:[#allocation2 + $0xa0] sm:$0xff] %v203
    %643 = vst [vmem:[#allocation2 + $0xa8] sm:$0xff] %v316
    %644 = vst [vmem:[#allocation2 + $0xb0] sm:$0xff] %v429
    %645 = vst [vmem:[#allocation2 + $0xb8] sm:$0xff] %v542
    %646 = vst [vmem:[#allocation2 + $0xc0] sm:$0xff] %v206
    %647 = vst [vmem:[#allocation2 + $0xc8] sm:$0xff] %v319
    %648 = vst [vmem:[#allocation2 + $0xd0] sm:$0xff] %v432
    %649 = vst [vmem:[#allocation2 + $0xd8] sm:$0xff] %v545
    %650 = vst [vmem:[#allocation2 + $0xe0] sm:$0xff] %v209
    %651 = vst [vmem:[#allocation2 + $0xe8] sm:$0xff] %v322
    %652 = vst [vmem:[#allocation2 + $0xf0] sm:$0xff] %v435
    %653 = vst [vmem:[#allocation2 + $0xf8] sm:$0xff] %v548
    %654 = vst [vmem:[#allocation2 + $0x100] sm:$0xff] %v212
    %655 = vst [vmem:[#allocation2 + $0x108] sm:$0xff] %v325
    %656 = vst [vmem:[#allocation2 + $0x110] sm:$0xff] %v438
    %657 = vst [vmem:[#allocation2 + $0x118] sm:$0xff] %v551
    %658 = vst [vmem:[#allocation2 + $0x120] sm:$0xff] %v215
    %659 = vst [vmem:[#allocation2 + $0x128] sm:$0xff] %v328
    %660 = vst [vmem:[#allocation2 + $0x130] sm:$0xff] %v441
    %661 = vst [vmem:[#allocation2 + $0x138] sm:$0xff] %v554
    %662 = vst [vmem:[#allocation2 + $0x140] sm:$0xff] %v218
    %663 = vst [vmem:[#allocation2 + $0x148] sm:$0xff] %v331
    %664 = vst [vmem:[#allocation2 + $0x150] sm:$0xff] %v444
    %665 = vst [vmem:[#allocation2 + $0x158] sm:$0xff] %v557
    %666 = vst [vmem:[#allocation2 + $0x160] sm:$0xff] %v221
    %667 = vst [vmem:[#allocation2 + $0x168] sm:$0xff] %v334
    %668 = vst [vmem:[#allocation2 + $0x170] sm:$0xff] %v447
    %669 = vst [vmem:[#allocation2 + $0x178] sm:$0xff] %v560
    %670 = vst [vmem:[#allocation2 + $0x180] sm:$0xff] %v224
    %671 = vst [vmem:[#allocation2 + $0x188] sm:$0xff] %v337
    %672 = vst [vmem:[#allocation2 + $0x190] sm:$0xff] %v450
    %673 = vst [vmem:[#allocation2 + $0x198] sm:$0xff] %v563
    %674 = vst [vmem:[#allocation2 + $0x1a0] sm:$0xff] %v227
    %675 = vst [vmem:[#allocation2 + $0x1a8] sm:$0xff] %v340
    %676 = vst [vmem:[#allocation2 + $0x1b0] sm:$0xff] %v453
    %677 = vst [vmem:[#allocation2 + $0x1b8] sm:$0xff] %v566
    %678 = vst [vmem:[#allocation2 + $0x1c0] sm:$0xff] %v230
    %679 = vst [vmem:[#allocation2 + $0x1c8] sm:$0xff] %v343
    %680 = vst [vmem:[#allocation2 + $0x1d0] sm:$0xff] %v456
    %681 = vst [vmem:[#allocation2 + $0x1d8] sm:$0xff] %v569
    %682 = vst [vmem:[#allocation2 + $0x1e0] sm:$0xff] %v233
    %683 = vst [vmem:[#allocation2 + $0x1e8] sm:$0xff] %v346
    %684 = vst [vmem:[#allocation2 + $0x1f0] sm:$0xff] %v459
    %685 = vst [vmem:[#allocation2 + $0x1f8] sm:$0xff] %v572
    %686 = vst [vmem:[#allocation2 + $0x200] sm:$0xff] %v236
    %687 = vst [vmem:[#allocation2 + $0x208] sm:$0xff] %v349
    %688 = vst [vmem:[#allocation2 + $0x210] sm:$0xff] %v462
    %689 = vst [vmem:[#allocation2 + $0x218] sm:$0xff] %v575
    %690 = vst [vmem:[#allocation2 + $0x220] sm:$0xff] %v239
    %691 = vst [vmem:[#allocation2 + $0x228] sm:$0xff] %v352
    %692 = vst [vmem:[#allocation2 + $0x230] sm:$0xff] %v465
    %693 = vst [vmem:[#allocation2 + $0x238] sm:$0xff] %v578
    %694 = vst [vmem:[#allocation2 + $0x240] sm:$0xff] %v242
    %695 = vst [vmem:[#allocation2 + $0x248] sm:$0xff] %v355
    %696 = vst [vmem:[#allocation2 + $0x250] sm:$0xff] %v468
    %697 = vst [vmem:[#allocation2 + $0x258] sm:$0xff] %v581
    %698 = vst [vmem:[#allocation2 + $0x260] sm:$0xff] %v245
    %699 = vst [vmem:[#allocation2 + $0x268] sm:$0xff] %v358
    %700 = vst [vmem:[#allocation2 + $0x270] sm:$0xff] %v471
    %701 = vst [vmem:[#allocation2 + $0x278] sm:$0xff] %v584
    %702 = vst [vmem:[#allocation2 + $0x280] sm:$0xff] %v248
    %703 = vst [vmem:[#allocation2 + $0x288] sm:$0xff] %v361
    %704 = vst [vmem:[#allocation2 + $0x290] sm:$0xff] %v474
    %705 = vst [vmem:[#allocation2 + $0x298] sm:$0xff] %v587
    %706 = vst [vmem:[#allocation2 + $0x2a0] sm:$0xff] %v251
    %707 = vst [vmem:[#allocation2 + $0x2a8] sm:$0xff] %v364
    %708 = vst [vmem:[#allocation2 + $0x2b0] sm:$0xff] %v477
    %709 = vst [vmem:[#allocation2 + $0x2b8] sm:$0xff] %v590
    %710 = vst [vmem:[#allocation2 + $0x2c0] sm:$0xff] %v254
    %711 = vst [vmem:[#allocation2 + $0x2c8] sm:$0xff] %v367
    %712 = vst [vmem:[#allocation2 + $0x2d0] sm:$0xff] %v480
    %713 = vst [vmem:[#allocation2 + $0x2d8] sm:$0xff] %v593
    %714 = vst [vmem:[#allocation2 + $0x2e0] sm:$0xff] %v257
    %715 = vst [vmem:[#allocation2 + $0x2e8] sm:$0xff] %v370
    %716 = vst [vmem:[#allocation2 + $0x2f0] sm:$0xff] %v483
    %717 = vst [vmem:[#allocation2 + $0x2f8] sm:$0xff] %v596
    %718 = vst [vmem:[#allocation2 + $0x300] sm:$0xff] %v260
    %719 = vst [vmem:[#allocation2 + $0x308] sm:$0xff] %v373
    %720 = vst [vmem:[#allocation2 + $0x310] sm:$0xff] %v486
    %721 = vst [vmem:[#allocation2 + $0x318] sm:$0xff] %v599
    %722 = vst [vmem:[#allocation2 + $0x320] sm:$0xff] %v263
    %723 = vst [vmem:[#allocation2 + $0x328] sm:$0xff] %v376
    %724 = vst [vmem:[#allocation2 + $0x330] sm:$0xff] %v489
    %725 = vst [vmem:[#allocation2 + $0x338] sm:$0xff] %v602
    %726 = vst [vmem:[#allocation2 + $0x340] sm:$0xff] %v266
    %727 = vst [vmem:[#allocation2 + $0x348] sm:$0xff] %v379
    %728 = vst [vmem:[#allocation2 + $0x350] sm:$0xff] %v492
    %729 = vst [vmem:[#allocation2 + $0x358] sm:$0xff] %v605
    %730 = vst [vmem:[#allocation2 + $0x360] sm:$0xff] %v269
    %731 = vst [vmem:[#allocation2 + $0x368] sm:$0xff] %v382
    %732 = vst [vmem:[#allocation2 + $0x370] sm:$0xff] %v495
    %733 = vst [vmem:[#allocation2 + $0x378] sm:$0xff] %v608
    %734 = vst [vmem:[#allocation2 + $0x380] sm:$0xff] %v272
    %735 = vst [vmem:[#allocation2 + $0x388] sm:$0xff] %v385
    %736 = vst [vmem:[#allocation2 + $0x390] sm:$0xff] %v498
    %737 = vst [vmem:[#allocation2 + $0x398] sm:$0xff] %v611
    %738 = vst [vmem:[#allocation2 + $0x3a0] sm:$0xff] %v275
    %739 = vst [vmem:[#allocation2 + $0x3a8] sm:$0xff] %v388
    %740 = vst [vmem:[#allocation2 + $0x3b0] sm:$0xff] %v501
    %741 = vst [vmem:[#allocation2 + $0x3b8] sm:$0xff] %v614
    %742 = vst [vmem:[#allocation2 + $0x3c0] sm:$0xff] %v278
    %743 = vst [vmem:[#allocation2 + $0x3c8] sm:$0xff] %v391
    %744 = vst [vmem:[#allocation2 + $0x3d0] sm:$0xff] %v504
    %745 = vst [vmem:[#allocation2 + $0x3d8] sm:$0xff] %v617
    %746 = vst [vmem:[#allocation2 + $0x3e0] sm:$0xff] %v281
    %747 = vst [vmem:[#allocation2 + $0x3e8] sm:$0xff] %v394
    %748 = vst [vmem:[#allocation2 + $0x3f0] sm:$0xff] %v507
    %749 = vst [vmem:[#allocation2 + $0x3f8] sm:$0xff] %v620
    // Predicated region
    $region14: #{tpu_custom_call.1} parent=1 // pred_check
      _
    $region15: #{tpu_custom_call.1} parent=1 // pred_check_branch
      %751 = sbr.rel (0) target = $region17
    $region16: #{tpu_custom_call.1} parent=1 // pred_region
      %753 = vsyncadd [#allocation3], 0
      %s754 = sshll.u32 [#allocation2], 4
      %s755 = int_to_ptr.vmem [resolvable:$true] %s754
      %s756 = sshll.u32 %s3, 4
      %s757 = int_to_ptr.hbm [resolvable:$true] %s756
      %762 = dma.vmem_to_hbm [thread:$0]  %s755, 16384, %s757, [#allocation3], 512, 512, 32
    $region17: #{tpu_custom_call.1} parent=1 // pred_fallthru
      _
    // Predicated region
    $region18: #{tpu_custom_call.1} parent=1 // pred_check
      _
    $region19: #{tpu_custom_call.1} parent=1 // pred_check_branch
      %764 = sbr.rel (0) target = $region21
    $region20: #{tpu_custom_call.1} parent=1 // pred_region
      %766 = dma.done [#allocation3], 16384
    $region21: #{tpu_custom_call.1} parent=1 // pred_fallthru
      _
    %767 = vsyncpa [#allocation3], 1

</llo_original>
